<compile_context>
chip_gen: v7x
topology: tpu7x:2x2x1
jax: 0.10.0
libtpu: 0.0.40
codegen_flags: <defaults>
</compile_context>

<pallas_src>
import jax
import jax.numpy as jnp
from jax import lax
from jax.experimental import pallas as pl
from jax.experimental.pallas import tpu as pltpu


def _fold_bn(gamma, beta, mean, var, eps=1e-5):
    scale = gamma / jnp.sqrt(var + eps)
    bias = beta - mean * scale
    return scale, bias


def _pick_batch_block(N, C1, C2, HWp, p, vmem_budget_bytes=8 << 20):
    """Largest Nb (divisor of N) whose per-step working set fits the budget and
    which leaves >= 2 grid steps when N >= 2 (v7x has 2 TensorCores)."""
    # double-buffered in/out blocks + y1 + acc + 2p pre-masked copies, all f32
    bytes_per_img = 4 * HWp * (2 * C1 + 2 * C2 + (2 + 2 * p) * C2)
    nb = max(1, vmem_budget_bytes // max(bytes_per_img, 1))
    nb = min(nb, 64, N)
    if N >= 2:
        nb = min(nb, max(1, N // 2))
    while N % nb != 0:
        nb -= 1
    return max(nb, 1)


def _make_lightconv_kernel(H, W, HW, HWp, C1, C2, k, Nb):
    p = k // 2                       # autopad(k) for stride 1, dilation 1 (odd k)
    KK = k * k
    pad_tail = (HWp != HW)
    # Tiny matmuls waste the systolic array; threshold lowered per review (the MXU
    # slot is otherwise idle) but this path is unexercised at C1=4 test shapes.
    use_mxu = (C1 >= 32) and (C2 >= 32)

    def kernel(x_ref, prm_ref, msk_ref, o_ref):
        x = x_ref[...].astype(jnp.float32)               # (Nb, C1, HWp)
        prm = prm_ref[...]                               # (C2, C1+KK+2)
        w1 = prm[:, 0:C1]                                # (C2, C1)  * bn1 scale
        wd = prm[:, C1:C1 + KK]                          # (C2, KK)  * bn2 scale
        b1 = prm[:, C1 + KK:C1 + KK + 1]                 # (C2, 1)   folded BN1 bias
        b2 = prm[:, C1 + KK + 1:C1 + KK + 2]             # (C2, 1)   folded BN2 bias

        # ---- cv1: pointwise 1x1 conv (BN1 scale pre-folded) + BN1 bias ----
        if use_mxu:
            y1 = lax.dot_general(w1, x, (((1,), (1,)), ((), ())),
                                 preferred_element_type=jnp.float32)  # (C2, Nb, HWp)
            y1 = jnp.transpose(y1, (1, 0, 2))            # leading dims only
        else:
            # Small channel counts: C1 broadcast multiply-adds on the VPU, over the
            # whole Nb block at once (weight broadcasts happen once per grid step).
            y1 = x[:, 0:1, :] * w1[:, 0:1].reshape(1, C2, 1)
            for c1 in range(1, C1):
                y1 = y1 + x[:, c1:c1 + 1, :] * w1[:, c1:c1 + 1].reshape(1, C2, 1)
        y1 = y1 + b1.reshape(1, C2, 1)                   # (Nb, C2, HWp)

        if pad_tail:
            # Zero the padded tail so the flattened zero-fill shifts below still
            # reproduce zero-padding of y1 at the image border.
            y1 = y1 * msk_ref[2 * p:2 * p + 1, :].reshape(1, 1, HWp)

        # ---- column pre-masked copies (one per |ox|), hoisted out of the tap loop ----
        srcs = {0: y1}
        for ox in range(1, p + 1):
            srcs[ox] = y1 * msk_ref[ox - 1:ox, :].reshape(1, 1, HWp)
            srcs[-ox] = y1 * msk_ref[p + ox - 1:p + ox, :].reshape(1, 1, HWp)

        # ---- cv2: depthwise kxk 'same' conv (BN2 scale pre-folded into taps) ----
        # Every tap is a static lane shift (zero-fill handles the top/bottom padding)
        # of the appropriate column-pre-masked copy, then a broadcast MAC.
        pc = p * k + p
        acc = y1 * wd[:, pc:pc + 1].reshape(1, C2, 1)    # centre tap: no shift/mask
        zeros_cache = {}
        for dy in range(k):
            for dx in range(k):
                if dy == p and dx == p:
                    continue
                oy, ox = dy - p, dx - p
                s = oy * W + ox                          # flattened-index offset
                a = abs(s)
                if a >= HW:                              # tap fully out of bounds
                    continue
                if a not in zeros_cache:
                    zeros_cache[a] = jnp.zeros((Nb, C2, a), jnp.float32)
                src = srcs[ox]
                if s > 0:
                    shifted = jnp.concatenate([src[:, :, s:], zeros_cache[a]], axis=2)
                else:
                    shifted = jnp.concatenate([zeros_cache[a], src[:, :, :s]], axis=2)
                idx = dy * k + dx
                acc = acc + shifted * wd[:, idx:idx + 1].reshape(1, C2, 1)

        # ---- BN2 bias + ReLU ----
        o_ref[...] = jnp.maximum(acc + b2.reshape(1, C2, 1), 0.0).astype(o_ref.dtype)

    return kernel


def lightconv_pallas(x_nchw, params, k, io_dtype=jnp.float32):
    N, C1, H, W = x_nchw.shape
    C2 = params["w1"].shape[0]
    assert k % 2 == 1, "LightConv Pallas kernel assumes odd k ('same' autopad)"
    p = k // 2
    KK = k * k
    HW = H * W
    HWp = max(128, ((HW + 127) // 128) * 128)            # keep stores lane-dense

    s1, b1 = _fold_bn(params["g1"], params["b1"], params["m1"], params["v1"])
    s2, b2 = _fold_bn(params["g2"], params["b2"], params["m2"], params["v2"])

    # Fold BN scales into conv weights on the host; pack all params into one array.
    w1s = (params["w1"] * s1[:, None]).astype(jnp.float32)      # (C2, C1)
    wds = (params["wd"] * s2[:, None]).astype(jnp.float32)      # (C2, k*k)
    prm = jnp.concatenate(
        [w1s, wds, b1[:, None].astype(jnp.float32), b2[:, None].astype(jnp.float32)],
        axis=1)                                                  # (C2, C1+KK+2)

    # Host-precomputed column masks (2p rows) + optional padded-tail validity mask.
    col = jnp.arange(HWp, dtype=jnp.int32) % W
    rows = []
    for ox in range(1, p + 1):
        rows.append((col >= ox).astype(jnp.float32))             # for shifts with +ox
    for ox in range(1, p + 1):
        rows.append((col < W - ox).astype(jnp.float32))          # for shifts with -ox
    if HWp != HW:
        rows.append((jnp.arange(HWp) < HW).astype(jnp.float32))  # valid-tail mask
    if not rows:
        rows.append(jnp.ones((HWp,), jnp.float32))               # dummy (k == 1, no pad)
    masks = jnp.stack(rows)                                      # (R, HWp)
    R = masks.shape[0]

    # NCHW -> (N, C, HWp): metadata reshape + (only if needed) lane padding.
    x_flat = x_nchw.reshape(N, C1, HW).astype(io_dtype)
    if HWp != HW:
        x_flat = jnp.pad(x_flat, ((0, 0), (0, 0), (0, HWp - HW)))

    Nb = _pick_batch_block(N, C1, C2, HWp, p)
    kernel = _make_lightconv_kernel(H, W, HW, HWp, C1, C2, k, Nb)

    out_flat = pl.pallas_call(
        kernel,
        out_shape=jax.ShapeDtypeStruct((N, C2, HWp), io_dtype),
        grid=(N // Nb,),
        in_specs=[
            pl.BlockSpec((Nb, C1, HWp), lambda n: (n, 0, 0)),    # x (Nb images)
            pl.BlockSpec((C2, C1 + KK + 2), lambda n: (0, 0)),   # packed params
            pl.BlockSpec((R, HWp), lambda n: (0, 0)),            # column / tail masks
        ],
        out_specs=pl.BlockSpec((Nb, C2, HWp), lambda n: (n, 0, 0)),
        compiler_params=pltpu.CompilerParams(
            dimension_semantics=("parallel",),
            vmem_limit_bytes=32 * 1024 * 1024,
        ),
    )(x_flat, prm, masks)

    out_flat = out_flat[:, :, :HW]
    return out_flat.reshape(N, C2, H, W).astype(jnp.float32)


def lightconv_ref(x_nchw, params, k, eps=1e-5):
    """Pure-JAX reference mirroring PyTorch LightConv (eval-mode BN), NCHW."""
    C2, C1 = params["w1"].shape
    p = k // 2

    def bn(y, g, b, m, v):
        sh = (1, C2, 1, 1)
        return (y - m.reshape(sh)) / jnp.sqrt(v.reshape(sh) + eps) * g.reshape(sh) + b.reshape(sh)

    x = x_nchw.astype(jnp.float32)
    # cv1: 1x1 conv + BN (no act)
    w1 = params["w1"].reshape(C2, C1, 1, 1)
    y1 = lax.conv_general_dilated(x, w1, (1, 1), "VALID",
                                  dimension_numbers=("NCHW", "OIHW", "NCHW"))
    y1 = bn(y1, params["g1"], params["b1"], params["m1"], params["v1"])
    # cv2: depthwise kxk conv + BN + ReLU
    wd = params["wd"].reshape(C2, 1, k, k)
    y2 = lax.conv_general_dilated(y1, wd, (1, 1), [(p, p), (p, p)],
                                  dimension_numbers=("NCHW", "OIHW", "NCHW"),
                                  feature_group_count=C2)
    y2 = bn(y2, params["g2"], params["b2"], params["m2"], params["v2"])
    return jnp.maximum(y2, 0.0)


if __name__ == "__main__":
    N, C1, C2, H, W, k = 2, 4, 8, 16, 16, 3

    key = jax.random.PRNGKey(0)
    keys = jax.random.split(key, 11)
    x = jax.random.normal(keys[0], (N, C1, H, W), jnp.float32)

    # Deterministic synthetic parameters (shapes implied by the module's __init__):
    #   cv1.conv.weight (C2,C1,1,1) -> stored as (C2,C1)
    #   cv2.conv.weight (C2,1,k,k)  -> stored as (C2,k*k)
    #   BatchNorm2d(C2): gamma/beta/running_mean/running_var of shape (C2,)
    params = {
        "w1": 0.2 * jax.random.normal(keys[1], (C2, C1), jnp.float32),
        "g1": 1.0 + 0.1 * jax.random.normal(keys[2], (C2,), jnp.float32),
        "b1": 0.1 * jax.random.normal(keys[3], (C2,), jnp.float32),
        "m1": 0.1 * jax.random.normal(keys[4], (C2,), jnp.float32),
        "v1": 1.0 + 0.1 * jnp.abs(jax.random.normal(keys[5], (C2,), jnp.float32)),
        "wd": 0.2 * jax.random.normal(keys[6], (C2, k * k), jnp.float32),
        "g2": 1.0 + 0.1 * jax.random.normal(keys[7], (C2,), jnp.float32),
        "b2": 0.1 * jax.random.normal(keys[8], (C2,), jnp.float32),
        "m2": 0.1 * jax.random.normal(keys[9], (C2,), jnp.float32),
        "v2": 1.0 + 0.1 * jnp.abs(jax.random.normal(keys[10], (C2,), jnp.float32)),
    }

    out = lightconv_pallas(x, params, k)
    out = jax.block_until_ready(out)

    ref = lightconv_ref(x, params, k)
    assert out.shape == (N, C2, H, W), out.shape
    if not jnp.allclose(out, ref, atol=1e-4, rtol=1e-4):
        raise AssertionError("Pallas LightConv does not match reference")
    print("KERNEL_OK")
</pallas_src>

<mosaic_0001>
module attributes {stable_mosaic.version = 11 : i64} {
  func.func @kernel(%arg0: i32, %arg1: memref<1x4x256xf32, #tpu.memory_space<vmem>>, %arg2: memref<8x15xf32, #tpu.memory_space<vmem>>, %arg3: memref<2x256xf32, #tpu.memory_space<vmem>>, %arg4: memref<1x8x256xf32, #tpu.memory_space<vmem>>) attributes {dimension_semantics = [#tpu.dimension_semantics<parallel>], iteration_bounds = array<i64: 2>, scalar_prefetch = 0 : i64, scratch_operands = 0 : i64, tpu.core_type = #tpu.core_type<tc>, window_params = [{transform_indices = @transform_0, window_bounds = array<i64: 1, 4, 256>}, {pipeline_mode = #tpu.pipeline_mode<synchronous>, transform_indices = @transform_1, window_bounds = array<i64: 8, 15>}, {pipeline_mode = #tpu.pipeline_mode<synchronous>, transform_indices = @transform_2, window_bounds = array<i64: 2, 256>}, {transform_indices = @transform_3, window_bounds = array<i64: 1, 8, 256>}]} {
    %c0 = arith.constant 0 : index
    %c0_0 = arith.constant 0 : index
    %c0_1 = arith.constant 0 : index
    %0 = vector.load %arg1[%c0, %c0_0, %c0_1] : memref<1x4x256xf32, #tpu.memory_space<vmem>>, vector<1x4x256xf32>
    %c0_2 = arith.constant 0 : index
    %c0_3 = arith.constant 0 : index
    %1 = vector.load %arg2[%c0_2, %c0_3] : memref<8x15xf32, #tpu.memory_space<vmem>>, vector<8x15xf32>
    %2 = vector.extract_strided_slice %1 {offsets = [0, 0], sizes = [8, 4], strides = [1, 1]} : vector<8x15xf32> to vector<8x4xf32>
    %3 = vector.extract_strided_slice %1 {offsets = [0, 4], sizes = [8, 9], strides = [1, 1]} : vector<8x15xf32> to vector<8x9xf32>
    %4 = vector.extract_strided_slice %1 {offsets = [0, 13], sizes = [8, 1], strides = [1, 1]} : vector<8x15xf32> to vector<8x1xf32>
    %5 = vector.extract_strided_slice %1 {offsets = [0, 14], sizes = [8, 1], strides = [1, 1]} : vector<8x15xf32> to vector<8x1xf32>
    %6 = vector.extract_strided_slice %0 {offsets = [0, 0, 0], sizes = [1, 1, 256], strides = [1, 1, 1]} : vector<1x4x256xf32> to vector<1x1x256xf32>
    %7 = vector.extract_strided_slice %2 {offsets = [0, 0], sizes = [8, 1], strides = [1, 1]} : vector<8x4xf32> to vector<8x1xf32>
    %8 = vector.shape_cast %7 : vector<8x1xf32> to vector<1x8x1xf32>
    %9 = vector.broadcast %6 : vector<1x1x256xf32> to vector<1x8x256xf32>
    %10 = vector.broadcast %8 : vector<1x8x1xf32> to vector<1x8x256xf32>
    %11 = arith.mulf %9, %10 : vector<1x8x256xf32>
    %12 = vector.extract_strided_slice %0 {offsets = [0, 1, 0], sizes = [1, 1, 256], strides = [1, 1, 1]} : vector<1x4x256xf32> to vector<1x1x256xf32>
    %13 = vector.extract_strided_slice %2 {offsets = [0, 1], sizes = [8, 1], strides = [1, 1]} : vector<8x4xf32> to vector<8x1xf32>
    %14 = vector.shape_cast %13 : vector<8x1xf32> to vector<1x8x1xf32>
    %15 = vector.broadcast %12 : vector<1x1x256xf32> to vector<1x8x256xf32>
    %16 = vector.broadcast %14 : vector<1x8x1xf32> to vector<1x8x256xf32>
    %17 = arith.mulf %15, %16 : vector<1x8x256xf32>
    %18 = arith.addf %11, %17 : vector<1x8x256xf32>
    %19 = vector.extract_strided_slice %0 {offsets = [0, 2, 0], sizes = [1, 1, 256], strides = [1, 1, 1]} : vector<1x4x256xf32> to vector<1x1x256xf32>
    %20 = vector.extract_strided_slice %2 {offsets = [0, 2], sizes = [8, 1], strides = [1, 1]} : vector<8x4xf32> to vector<8x1xf32>
    %21 = vector.shape_cast %20 : vector<8x1xf32> to vector<1x8x1xf32>
    %22 = vector.broadcast %19 : vector<1x1x256xf32> to vector<1x8x256xf32>
    %23 = vector.broadcast %21 : vector<1x8x1xf32> to vector<1x8x256xf32>
    %24 = arith.mulf %22, %23 : vector<1x8x256xf32>
    %25 = arith.addf %18, %24 : vector<1x8x256xf32>
    %26 = vector.extract_strided_slice %0 {offsets = [0, 3, 0], sizes = [1, 1, 256], strides = [1, 1, 1]} : vector<1x4x256xf32> to vector<1x1x256xf32>
    %27 = vector.extract_strided_slice %2 {offsets = [0, 3], sizes = [8, 1], strides = [1, 1]} : vector<8x4xf32> to vector<8x1xf32>
    %28 = vector.shape_cast %27 : vector<8x1xf32> to vector<1x8x1xf32>
    %29 = vector.broadcast %26 : vector<1x1x256xf32> to vector<1x8x256xf32>
    %30 = vector.broadcast %28 : vector<1x8x1xf32> to vector<1x8x256xf32>
    %31 = arith.mulf %29, %30 : vector<1x8x256xf32>
    %32 = arith.addf %25, %31 : vector<1x8x256xf32>
    %33 = vector.shape_cast %4 : vector<8x1xf32> to vector<1x8x1xf32>
    %34 = vector.broadcast %33 : vector<1x8x1xf32> to vector<1x8x256xf32>
    %35 = arith.addf %32, %34 : vector<1x8x256xf32>
    %c0_4 = arith.constant 0 : index
    %c0_5 = arith.constant 0 : index
    %36 = vector.load %arg3[%c0_4, %c0_5] : memref<2x256xf32, #tpu.memory_space<vmem>>, vector<1x256xf32>
    %37 = vector.shape_cast %36 : vector<1x256xf32> to vector<1x1x256xf32>
    %38 = vector.broadcast %37 : vector<1x1x256xf32> to vector<1x8x256xf32>
    %39 = arith.mulf %35, %38 : vector<1x8x256xf32>
    %c1 = arith.constant 1 : index
    %c0_6 = arith.constant 0 : index
    %40 = vector.load %arg3[%c1, %c0_6] : memref<2x256xf32, #tpu.memory_space<vmem>>, vector<1x256xf32>
    %41 = vector.shape_cast %40 : vector<1x256xf32> to vector<1x1x256xf32>
    %42 = vector.broadcast %41 : vector<1x1x256xf32> to vector<1x8x256xf32>
    %43 = arith.mulf %35, %42 : vector<1x8x256xf32>
    %44 = vector.extract_strided_slice %3 {offsets = [0, 4], sizes = [8, 1], strides = [1, 1]} : vector<8x9xf32> to vector<8x1xf32>
    %45 = vector.shape_cast %44 : vector<8x1xf32> to vector<1x8x1xf32>
    %46 = vector.broadcast %45 : vector<1x8x1xf32> to vector<1x8x256xf32>
    %47 = arith.mulf %35, %46 : vector<1x8x256xf32>
    %cst = arith.constant 0.000000e+00 : f32
    %48 = vector.broadcast %cst : f32 to vector<1x8x17xf32>
    %49 = vector.extract_strided_slice %43 {offsets = [0, 0, 0], sizes = [1, 8, 239], strides = [1, 1, 1]} : vector<1x8x256xf32> to vector<1x8x239xf32>
    %50 = tpu.concatenate %48, %49 in 2 : vector<1x8x17xf32>, vector<1x8x239xf32> -> vector<1x8x256xf32>
    %51 = vector.extract_strided_slice %3 {offsets = [0, 0], sizes = [8, 1], strides = [1, 1]} : vector<8x9xf32> to vector<8x1xf32>
    %52 = vector.shape_cast %51 : vector<8x1xf32> to vector<1x8x1xf32>
    %53 = vector.broadcast %52 : vector<1x8x1xf32> to vector<1x8x256xf32>
    %54 = arith.mulf %50, %53 : vector<1x8x256xf32>
    %55 = arith.addf %47, %54 : vector<1x8x256xf32>
    %cst_7 = arith.constant 0.000000e+00 : f32
    %56 = vector.broadcast %cst_7 : f32 to vector<1x8x16xf32>
    %57 = vector.extract_strided_slice %35 {offsets = [0, 0, 0], sizes = [1, 8, 240], strides = [1, 1, 1]} : vector<1x8x256xf32> to vector<1x8x240xf32>
    %58 = tpu.concatenate %56, %57 in 2 : vector<1x8x16xf32>, vector<1x8x240xf32> -> vector<1x8x256xf32>
    %59 = vector.extract_strided_slice %3 {offsets = [0, 1], sizes = [8, 1], strides = [1, 1]} : vector<8x9xf32> to vector<8x1xf32>
    %60 = vector.shape_cast %59 : vector<8x1xf32> to vector<1x8x1xf32>
    %61 = vector.broadcast %60 : vector<1x8x1xf32> to vector<1x8x256xf32>
    %62 = arith.mulf %58, %61 : vector<1x8x256xf32>
    %63 = arith.addf %55, %62 : vector<1x8x256xf32>
    %cst_8 = arith.constant 0.000000e+00 : f32
    %64 = vector.broadcast %cst_8 : f32 to vector<1x8x15xf32>
    %65 = vector.extract_strided_slice %39 {offsets = [0, 0, 0], sizes = [1, 8, 241], strides = [1, 1, 1]} : vector<1x8x256xf32> to vector<1x8x241xf32>
    %66 = tpu.concatenate %64, %65 in 2 : vector<1x8x15xf32>, vector<1x8x241xf32> -> vector<1x8x256xf32>
    %67 = vector.extract_strided_slice %3 {offsets = [0, 2], sizes = [8, 1], strides = [1, 1]} : vector<8x9xf32> to vector<8x1xf32>
    %68 = vector.shape_cast %67 : vector<8x1xf32> to vector<1x8x1xf32>
    %69 = vector.broadcast %68 : vector<1x8x1xf32> to vector<1x8x256xf32>
    %70 = arith.mulf %66, %69 : vector<1x8x256xf32>
    %71 = arith.addf %63, %70 : vector<1x8x256xf32>
    %cst_9 = arith.constant 0.000000e+00 : f32
    %72 = vector.broadcast %cst_9 : f32 to vector<1x8x1xf32>
    %73 = vector.extract_strided_slice %43 {offsets = [0, 0, 0], sizes = [1, 8, 255], strides = [1, 1, 1]} : vector<1x8x256xf32> to vector<1x8x255xf32>
    %74 = tpu.concatenate %72, %73 in 2 : vector<1x8x1xf32>, vector<1x8x255xf32> -> vector<1x8x256xf32>
    %75 = vector.extract_strided_slice %3 {offsets = [0, 3], sizes = [8, 1], strides = [1, 1]} : vector<8x9xf32> to vector<8x1xf32>
    %76 = vector.shape_cast %75 : vector<8x1xf32> to vector<1x8x1xf32>
    %77 = vector.broadcast %76 : vector<1x8x1xf32> to vector<1x8x256xf32>
    %78 = arith.mulf %74, %77 : vector<1x8x256xf32>
    %79 = arith.addf %71, %78 : vector<1x8x256xf32>
    %80 = vector.extract_strided_slice %39 {offsets = [0, 0, 1], sizes = [1, 8, 255], strides = [1, 1, 1]} : vector<1x8x256xf32> to vector<1x8x255xf32>
    %81 = tpu.concatenate %80, %72 in 2 : vector<1x8x255xf32>, vector<1x8x1xf32> -> vector<1x8x256xf32>
    %82 = vector.extract_strided_slice %3 {offsets = [0, 5], sizes = [8, 1], strides = [1, 1]} : vector<8x9xf32> to vector<8x1xf32>
    %83 = vector.shape_cast %82 : vector<8x1xf32> to vector<1x8x1xf32>
    %84 = vector.broadcast %83 : vector<1x8x1xf32> to vector<1x8x256xf32>
    %85 = arith.mulf %81, %84 : vector<1x8x256xf32>
    %86 = arith.addf %79, %85 : vector<1x8x256xf32>
    %87 = vector.extract_strided_slice %43 {offsets = [0, 0, 15], sizes = [1, 8, 241], strides = [1, 1, 1]} : vector<1x8x256xf32> to vector<1x8x241xf32>
    %88 = tpu.concatenate %87, %64 in 2 : vector<1x8x241xf32>, vector<1x8x15xf32> -> vector<1x8x256xf32>
    %89 = vector.extract_strided_slice %3 {offsets = [0, 6], sizes = [8, 1], strides = [1, 1]} : vector<8x9xf32> to vector<8x1xf32>
    %90 = vector.shape_cast %89 : vector<8x1xf32> to vector<1x8x1xf32>
    %91 = vector.broadcast %90 : vector<1x8x1xf32> to vector<1x8x256xf32>
    %92 = arith.mulf %88, %91 : vector<1x8x256xf32>
    %93 = arith.addf %86, %92 : vector<1x8x256xf32>
    %94 = vector.extract_strided_slice %35 {offsets = [0, 0, 16], sizes = [1, 8, 240], strides = [1, 1, 1]} : vector<1x8x256xf32> to vector<1x8x240xf32>
    %95 = tpu.concatenate %94, %56 in 2 : vector<1x8x240xf32>, vector<1x8x16xf32> -> vector<1x8x256xf32>
    %96 = vector.extract_strided_slice %3 {offsets = [0, 7], sizes = [8, 1], strides = [1, 1]} : vector<8x9xf32> to vector<8x1xf32>
    %97 = vector.shape_cast %96 : vector<8x1xf32> to vector<1x8x1xf32>
    %98 = vector.broadcast %97 : vector<1x8x1xf32> to vector<1x8x256xf32>
    %99 = arith.mulf %95, %98 : vector<1x8x256xf32>
    %100 = arith.addf %93, %99 : vector<1x8x256xf32>
    %101 = vector.extract_strided_slice %39 {offsets = [0, 0, 17], sizes = [1, 8, 239], strides = [1, 1, 1]} : vector<1x8x256xf32> to vector<1x8x239xf32>
    %102 = tpu.concatenate %101, %48 in 2 : vector<1x8x239xf32>, vector<1x8x17xf32> -> vector<1x8x256xf32>
    %103 = vector.extract_strided_slice %3 {offsets = [0, 8], sizes = [8, 1], strides = [1, 1]} : vector<8x9xf32> to vector<8x1xf32>
    %104 = vector.shape_cast %103 : vector<8x1xf32> to vector<1x8x1xf32>
    %105 = vector.broadcast %104 : vector<1x8x1xf32> to vector<1x8x256xf32>
    %106 = arith.mulf %102, %105 : vector<1x8x256xf32>
    %107 = arith.addf %100, %106 : vector<1x8x256xf32>
    %108 = vector.shape_cast %5 : vector<8x1xf32> to vector<1x8x1xf32>
    %109 = vector.broadcast %108 : vector<1x8x1xf32> to vector<1x8x256xf32>
    %110 = arith.addf %107, %109 : vector<1x8x256xf32>
    %cst_10 = arith.constant 0.000000e+00 : f32
    %111 = vector.broadcast %cst_10 : f32 to vector<1x8x256xf32>
    %112 = arith.maximumf %110, %111 : vector<1x8x256xf32>
    %c0_11 = arith.constant 0 : index
    %c0_12 = arith.constant 0 : index
    %c0_13 = arith.constant 0 : index
    %113 = vector.load %arg4[%c0_11, %c0_12, %c0_13] : memref<1x8x256xf32, #tpu.memory_space<vmem>>, vector<1x8x256xf32>
    tpu.vector_store %arg4[%c0_11, %c0_12, %c0_13], %112 {strides = array<i32>} : memref<1x8x256xf32, #tpu.memory_space<vmem>>, vector<1x8x256xf32>,
    return
  }
  func.func @transform_0(%arg0: i32) -> (i32, i32, i32) {
    %c0_i32 = arith.constant 0 : i32
    %c0_i32_0 = arith.constant 0 : i32
    %c0_i32_1 = arith.constant 0 : i32
    return %arg0, %c0_i32, %c0_i32_0 : i32, i32, i32
  }
  func.func @transform_1(%arg0: i32) -> (i32, i32) {
    %c0_i32 = arith.constant 0 : i32
    %c0_i32_0 = arith.constant 0 : i32
    %c0_i32_1 = arith.constant 0 : i32
    return %c0_i32, %c0_i32_0 : i32, i32
  }
  func.func @transform_2(%arg0: i32) -> (i32, i32) {
    %c0_i32 = arith.constant 0 : i32
    %c0_i32_0 = arith.constant 0 : i32
    %c0_i32_1 = arith.constant 0 : i32
    return %c0_i32, %c0_i32_0 : i32, i32
  }
  func.func @transform_3(%arg0: i32) -> (i32, i32, i32) {
    %c0_i32 = arith.constant 0 : i32
    %c0_i32_0 = arith.constant 0 : i32
    %c0_i32_1 = arith.constant 0 : i32
    return %arg0, %c0_i32, %c0_i32_0 : i32, i32, i32
  }
}

</mosaic_0001>

<llo_original>
// kernel: tpu_custom_call.1
$region0: #{tpu_custom_call.1}
  #allocation0 [shape = 'u32[]', space=smem, size = 0x4, offset = 0x4, fixed_abs, tag = 'smem constant byte address 0x4 - core index']
  #allocation1 [shape = 'u32[144,128]{1,0:T(1,128)}', space=vmem, size = 0x12000, scoped, tag = 'internal scratch']
  %s0 = inlined_call_operand.hbm [shape: f32[2,4,256], index: 0, kind: input, shape index: {}]
  %s1 = inlined_call_operand.hbm [shape: f32[8,15], index: 1, kind: input, shape index: {}]
  %s2 = inlined_call_operand.vmem [shape: f32[2,256], index: 2, kind: input, shape index: {}]
  %s3 = inlined_call_operand.hbm [shape: f32[2,8,256], index: 3, kind: output, shape index: {}]
  %s4 = sld [smem:[#allocation0]]
  $region53: #{tpu_custom_call.1} parent=0
    _
  %s6 = ssub.s32 1, %s4
  %s7 = scalar_select 0, %s6, %s4
  $region1: #{tpu_custom_call.1} parent=0
    #allocation2 [shape = 'u8[8192]{0}', space=vmem, size = 0x2000, scoped, tag = 'input window, operand 0']
    #allocation3 [shape = 's32[2]{0}', space=sflag, size = 0x8, scoped, tag = 'scoped memory for tpu_custom_call.1']
    #allocation4 [shape = 's32[2]{0}', space=sflag, size = 0x8, scoped, tag = 'scoped memory for tpu_custom_call.1']
    #allocation5 [shape = 'u8[4096]{0}', space=vmem, size = 0x1000, scoped, tag = 'input window, operand 1, single buffered']
    #allocation6 [shape = 's32[1]{0}', space=sflag, size = 0x4, scoped, tag = 'scoped memory for tpu_custom_call.1']
    #allocation7 [shape = 'u8[16384]{0}', space=vmem, size = 0x4000, scoped, tag = 'output window, operand 0']
    %8 = vsyncpa [#allocation3], 0
    %s9 = scalar_lea.sflag [#allocation3], 1
    %10 = vsyncpa %s9, 0
    %11 = vsyncpa [#allocation6], 0
    %12 = vsyncpa [#allocation4], 0
    %s13 = scalar_lea.sflag [#allocation4], 1
    %14 = vsyncpa %s13, 0
    loop: start=0, step=1, limit=4
    $region2: #{tpu_custom_call.1} parent=1 // loop_pre_header
      _
    $region3: #{tpu_custom_call.1} parent=1 // loop_header
      %s16 = sphi 0, %s20
      %p17 = scmp.ge.s32.totalorder %s16, 4
      %s26 = sphi 0, %s28
      %s29 = sphi 0, %s26
      %s30 = sphi 0, %s29
      %s46 = sphi 0, %s30
      %s50 = sphi 0, %s50
      %s52 = sphi 0, %s50
      %s53 = sphi 0, %s52
      %s67 = sphi 0, %s53
      %s71 = sphi 0, %s71
      %s73 = sphi 0, %s71
      %s74 = sphi 0, %s73
      %s88 = sphi 0, %s74
      %s94 = sphi 0, %s96
      %s97 = sphi 0, %s94
      %s98 = sphi 0, %s97
      %s114 = sphi 0, %s98
    $region4: #{tpu_custom_call.1} parent=1 // loop_header_branch
      %19 = sbr.rel (%p17) target = $region8
    $region5: #{tpu_custom_call.1} parent=1 // loop_body
      %s21 = ssub.s32 %s16, 1
      %s22 = ssub.s32 %s16, 2
      %s23 = sadd.s32 %s16, 1
      %s24 = ssub.s32 %s16, %s23
      %p25 = scmp.eq.s32.totalorder %s24, 0
      %s27 = sadd.s32 %s26, 1
      %s28 = scalar_select %p25, %s26, %s27
      %p31 = pneg %p25
      %p32 = scmp.eq.s32.totalorder %s16, 1
      %p33 = por %p31, %p32
      %p34 = scmp.ne.s32.totalorder %s26, %s29
      %p35 = scmp.eq.s32.totalorder %s16, 0
      %p36 = por %p34, %p35
      %p37 = scmp.ne.s32.totalorder %s26, %s29
      %p38 = scmp.eq.s32.totalorder %s21, 1
      %p39 = por %p37, %p38
      %p40 = scmp.ne.s32.totalorder %s29, %s30
      %p41 = scmp.eq.s32.totalorder %s21, 0
      %p42 = por %p40, %p41
      %p43 = scmp.ne.s32.totalorder %s29, %s30
      %p44 = scmp.eq.s32.totalorder %s22, 1
      %p45 = por %p43, %p44
      %p47 = scmp.ne.s32.totalorder %s30, %s46
      %p48 = scmp.eq.s32.totalorder %s22, 0
      %p49 = por %p47, %p48
      %s51 = sadd.s32 %s50, 1
      %p54 = scmp.eq.s32.totalorder %s16, 1
      %p55 = scmp.ne.s32.totalorder %s50, %s52
      %p56 = scmp.eq.s32.totalorder %s16, 0
      %p57 = por %p55, %p56
      %p58 = scmp.ne.s32.totalorder %s50, %s52
      %p59 = scmp.eq.s32.totalorder %s21, 1
      %p60 = por %p58, %p59
      %p61 = scmp.ne.s32.totalorder %s52, %s53
      %p62 = scmp.eq.s32.totalorder %s21, 0
      %p63 = por %p61, %p62
      %p64 = scmp.ne.s32.totalorder %s52, %s53
      %p65 = scmp.eq.s32.totalorder %s22, 1
      %p66 = por %p64, %p65
      %p68 = scmp.ne.s32.totalorder %s53, %s67
      %p69 = scmp.eq.s32.totalorder %s22, 0
      %p70 = por %p68, %p69
      %s72 = sadd.s32 %s71, 1
      %p75 = scmp.eq.s32.totalorder %s16, 1
      %p76 = scmp.ne.s32.totalorder %s71, %s73
      %p77 = scmp.eq.s32.totalorder %s16, 0
      %p78 = por %p76, %p77
      %p79 = scmp.ne.s32.totalorder %s71, %s73
      %p80 = scmp.eq.s32.totalorder %s21, 1
      %p81 = por %p79, %p80
      %p82 = scmp.ne.s32.totalorder %s73, %s74
      %p83 = scmp.eq.s32.totalorder %s21, 0
      %p84 = por %p82, %p83
      %p85 = scmp.ne.s32.totalorder %s73, %s74
      %p86 = scmp.eq.s32.totalorder %s22, 1
      %p87 = por %p85, %p86
      %p89 = scmp.ne.s32.totalorder %s74, %s88
      %p90 = scmp.eq.s32.totalorder %s22, 0
      %p91 = por %p89, %p90
      %s92 = ssub.s32 %s16, %s23
      %p93 = scmp.eq.s32.totalorder %s92, 0
      %s95 = sadd.s32 %s94, 1
      %s96 = scalar_select %p93, %s94, %s95
      %p99 = pneg %p93
      %p100 = scmp.eq.s32.totalorder %s16, 1
      %p101 = por %p99, %p100
      %p102 = scmp.ne.s32.totalorder %s94, %s97
      %p103 = scmp.eq.s32.totalorder %s16, 0
      %p104 = por %p102, %p103
      %p105 = scmp.ne.s32.totalorder %s94, %s97
      %p106 = scmp.eq.s32.totalorder %s21, 1
      %p107 = por %p105, %p106
      %p108 = scmp.ne.s32.totalorder %s97, %s98
      %p109 = scmp.eq.s32.totalorder %s21, 0
      %p110 = por %p108, %p109
      %p111 = scmp.ne.s32.totalorder %s97, %s98
      %p112 = scmp.eq.s32.totalorder %s22, 1
      %p113 = por %p111, %p112
      %p115 = scmp.ne.s32.totalorder %s98, %s114
      %p116 = scmp.eq.s32.totalorder %s22, 0
      %p117 = por %p115, %p116
      %p118 = scmp.le.s32.totalorder 1, %s16
      %p119 = scmp.lt.s32.totalorder %s16, 3
      %p120 = pnand %p118, %p119
      %p121 = pneg %p120
      // Predicated region
      $region9: #{tpu_custom_call.1} parent=5 // pred_check
        _
      $region10: #{tpu_custom_call.1} parent=5 // pred_check_branch
        %123 = sbr.rel (%p120) target = $region12
      $region11: #{tpu_custom_call.1} parent=5 // pred_region
        %s124 = ssub.s32 %s16, 1
        // Predicated region
        $region13: #{tpu_custom_call.1} parent=11 // pred_check
          %p125 = pneg %p63
        $region14: #{tpu_custom_call.1} parent=11 // pred_check_branch
          %127 = sbr.rel (%p125) target = $region16
        $region15: #{tpu_custom_call.1} parent=11 // pred_region
          %s129 = ssub.s32 128, 128
          %130 = vsyncadd [#allocation6], %s129
          %s132 = sshll.u32 [#allocation5], 4
          %s133 = int_to_ptr.vmem [resolvable:$true] %s132
          %135 = dma.hbm_to_vmem [thread:$0]  %s1, 128, %s133, [#allocation6]
        $region16: #{tpu_custom_call.1} parent=11 // pred_fallthru
          _
        // Predicated region
        $region17: #{tpu_custom_call.1} parent=11 // pred_check
          %p136 = pneg %p84
        $region18: #{tpu_custom_call.1} parent=11 // pred_check_branch
          %138 = sbr.rel (%p136) target = $region20
        $region19: #{tpu_custom_call.1} parent=11 // pred_region
          _
        $region20: #{tpu_custom_call.1} parent=11 // pred_fallthru
          _
      $region12: #{tpu_custom_call.1} parent=5 // pred_fallthru
        _
      %p139 = scmp.lt.s32.totalorder %s16, 2
      // Predicated region
      $region21: #{tpu_custom_call.1} parent=5 // pred_check
        %p140 = pneg %p139
      $region22: #{tpu_custom_call.1} parent=5 // pred_check_branch
        %142 = sbr.rel (%p140) target = $region24
      $region23: #{tpu_custom_call.1} parent=5 // pred_region
        // Predicated region
        $region25: #{tpu_custom_call.1} parent=23 // pred_check
          %p143 = pneg %p36
        $region26: #{tpu_custom_call.1} parent=23 // pred_check_branch
          %145 = sbr.rel (%p143) target = $region28
        $region27: #{tpu_custom_call.1} parent=23 // pred_region
          %s146 = sand.u32 %s26, 1
          %s147 = scalar_lea.sflag [#allocation3], %s146
          %s148 = sand.u32 %s26, 1
          %s149 = smul.addr %s148, 8
          %s150 = scalar_lea.vmem [#allocation2], %s149
          %s152 = ssub.s32 128, 128
          %153 = vsyncadd %s147, %s152
          %s154 = smul.addr %s16, 2
          %s155 = smul.addr %s154, 64
          %s156 = scalar_lea.hbm %s0, %s155
          %s158 = sshll.u32 %s150, 4
          %s159 = int_to_ptr.vmem [resolvable:$true] %s158
          %161 = dma.hbm_to_vmem [thread:$0]  %s156, 128, %s159, %s147
        $region28: #{tpu_custom_call.1} parent=23 // pred_fallthru
          _
      $region24: #{tpu_custom_call.1} parent=5 // pred_fallthru
        _
      %p162 = scmp.le.s32.totalorder 1, %s16
      %p163 = scmp.lt.s32.totalorder %s16, 3
      %p164 = pnand %p162, %p163
      %p165 = pneg %p164
      // Predicated region
      $region29: #{tpu_custom_call.1} parent=5 // pred_check
        _
      $region30: #{tpu_custom_call.1} parent=5 // pred_check_branch
        %167 = sbr.rel (%p164) target = $region32
      $region31: #{tpu_custom_call.1} parent=5 // pred_region
        %s168 = ssub.s32 %s16, 1
        %s169 = sand.u32 %s29, 1
        %s170 = scalar_lea.sflag [#allocation3], %s169
        %s171 = sand.u32 %s29, 1
        %s172 = smul.addr %s171, 8
        %s173 = scalar_lea.vmem [#allocation2], %s172
        // Predicated region
        $region33: #{tpu_custom_call.1} parent=31 // pred_check
          %p174 = pneg %p42
        $region34: #{tpu_custom_call.1} parent=31 // pred_check_branch
          %176 = sbr.rel (%p174) target = $region36
        $region35: #{tpu_custom_call.1} parent=31 // pred_region
          %177 = dma.done %s170, 128
        $region36: #{tpu_custom_call.1} parent=31 // pred_fallthru
          _
        // Predicated region
        $region37: #{tpu_custom_call.1} parent=31 // pred_check
          %p178 = pneg %p63
        $region38: #{tpu_custom_call.1} parent=31 // pred_check_branch
          %180 = sbr.rel (%p178) target = $region40
        $region39: #{tpu_custom_call.1} parent=31 // pred_region
          %181 = dma.done [#allocation6], 128
        $region40: #{tpu_custom_call.1} parent=31 // pred_fallthru
          _
        %s182 = sand.u32 %s29, 1
        %s183 = scalar_lea.sflag [#allocation3], %s182
        %s184 = sand.u32 %s29, 1
        %s185 = smul.addr %s184, 8
        %s186 = scalar_lea.vmem [#allocation2], %s185
        %p187 = pneg %p42
        %p188 = pneg %p39
        %p189 = pneg %p63
        %p190 = pneg %p60
        %p191 = pneg %p84
        %p192 = pneg %p81
        %p193 = pneg %p110
        %p194 = pneg %p107
        %s195 = sand.u32 %s97, 1
        %s196 = scalar_lea.sflag [#allocation4], %s195
        %s197 = sand.u32 %s97, 1
        %s198 = smul.addr %s197, 16
        %s199 = scalar_lea.vmem [#allocation7], %s198
        %v200 = vld [vmem:[%s173] sm:$0xff]
        %v201 = vld [vmem:[#allocation5] sm:$0xff]
        %v203 = vlaneseq
        %v204 = vshrl.u32 %v203, 7
        %v205 = vsub.s32 0, %v204
        %v206 = vrot.slane %v200, %v205
        %v207 = vlaneseq
        %v208 = vshrl.u32 %v207, 7
        %v209 = vsub.s32 4, %v208
        %v210 = vrot.slane %v200, %v209
        %v213 = vlaneseq
        %v214 = vshrl.u32 %v213, 7
        %v215 = vsub.s32 0, %v214
        %v216 = vrot.slane %v206, %v215
        %v217 = vlaneseq
        %v218 = vshrl.u32 %v217, 7
        %v219 = vsub.s32 0, %v218
        %v220 = vrot.slane %v210, %v219
        %222 = vset.pattern.permute.xlu0 0
        %223 = vperm.xlu0 %222, %v201
        %v224 = vpop.permute.xlu0 %223
        %v226 = vmul.f32 %v216, %v224
        %v227 = vmul.f32 %v220, %v224
        %v228 = vlaneseq
        %v229 = vshrl.u32 %v228, 7
        %v230 = vsub.s32 1, %v229
        %v231 = vrot.slane %v200, %v230
        %v232 = vlaneseq
        %v233 = vshrl.u32 %v232, 7
        %v234 = vsub.s32 5, %v233
        %v235 = vrot.slane %v200, %v234
        %v238 = vlaneseq
        %v239 = vshrl.u32 %v238, 7
        %v240 = vsub.s32 1, %v239
        %v241 = vrot.slane %v231, %v240
        %v242 = vlaneseq
        %v243 = vshrl.u32 %v242, 7
        %v244 = vsub.s32 1, %v243
        %v245 = vrot.slane %v235, %v244
        %246 = vset.pattern.permute.xlu0 1
        %247 = vperm.xlu0 %246, %v201
        %v248 = vpop.permute.xlu0 %247
        %v250 = vmul.f32 %v241, %v248
        %v251 = vmul.f32 %v245, %v248
        %v252 = vadd.f32 %v226, %v250
        %v253 = vadd.f32 %v227, %v251
        %v254 = vlaneseq
        %v255 = vshrl.u32 %v254, 7
        %v256 = vsub.s32 2, %v255
        %v257 = vrot.slane %v200, %v256
        %v258 = vlaneseq
        %v259 = vshrl.u32 %v258, 7
        %v260 = vsub.s32 6, %v259
        %v261 = vrot.slane %v200, %v260
        %v264 = vlaneseq
        %v265 = vshrl.u32 %v264, 7
        %v266 = vsub.s32 2, %v265
        %v267 = vrot.slane %v257, %v266
        %v268 = vlaneseq
        %v269 = vshrl.u32 %v268, 7
        %v270 = vsub.s32 2, %v269
        %v271 = vrot.slane %v261, %v270
        %272 = vset.pattern.permute.xlu0 2
        %273 = vperm.xlu0 %272, %v201
        %v274 = vpop.permute.xlu0 %273
        %v276 = vmul.f32 %v267, %v274
        %v277 = vmul.f32 %v271, %v274
        %v278 = vadd.f32 %v252, %v276
        %v279 = vadd.f32 %v253, %v277
        %v280 = vlaneseq
        %v281 = vshrl.u32 %v280, 7
        %v282 = vsub.s32 3, %v281
        %v283 = vrot.slane %v200, %v282
        %v284 = vlaneseq
        %v285 = vshrl.u32 %v284, 7
        %v286 = vsub.s32 7, %v285
        %v287 = vrot.slane %v200, %v286
        %v290 = vlaneseq
        %v291 = vshrl.u32 %v290, 7
        %v292 = vsub.s32 3, %v291
        %v293 = vrot.slane %v283, %v292
        %v294 = vlaneseq
        %v295 = vshrl.u32 %v294, 7
        %v296 = vsub.s32 3, %v295
        %v297 = vrot.slane %v287, %v296
        %298 = vset.pattern.permute.xlu0 3
        %299 = vperm.xlu0 %298, %v201
        %v300 = vpop.permute.xlu0 %299
        %v302 = vmul.f32 %v293, %v300
        %v303 = vmul.f32 %v297, %v300
        %v304 = vadd.f32 %v278, %v302
        %v305 = vadd.f32 %v279, %v303
        %306 = vset.pattern.permute.xlu0 13
        %307 = vperm.xlu0 %306, %v201
        %v308 = vpop.permute.xlu0 %307
        %v310 = vadd.f32 %v304, %v308
        %v311 = vadd.f32 %v305, %v308
        %v312 = vld [vmem:[%s2] ss:$2 sm:$0x3]
        %v314 = vlaneseq
        %v315 = vshrl.u32 %v314, 7
        %v316 = vsub.s32 0, %v315
        %v317 = vrot.slane %v312, %v316
        %v318 = vlaneseq
        %v319 = vshrl.u32 %v318, 7
        %v320 = vsub.s32 1, %v319
        %v321 = vrot.slane %v312, %v320
        %v324 = vmul.f32 %v310, %v317
        %v325 = vmul.f32 %v311, %v321
        %s326 = scalar_lea.vmem %s2, 1
        %v327 = vld [vmem:[%s326] ss:$2 sm:$0x3]
        %v329 = vlaneseq
        %v330 = vshrl.u32 %v329, 7
        %v331 = vsub.s32 0, %v330
        %v332 = vrot.slane %v327, %v331
        %v333 = vlaneseq
        %v334 = vshrl.u32 %v333, 7
        %v335 = vsub.s32 1, %v334
        %v336 = vrot.slane %v327, %v335
        %v339 = vmul.f32 %v310, %v332
        %v340 = vmul.f32 %v311, %v336
        %341 = vset.pattern.permute.xlu0 8
        %342 = vperm.xlu0 %341, %v201
        %v343 = vpop.permute.xlu0 %342
        %v345 = vmul.f32 %v310, %v343
        %v346 = vmul.f32 %v311, %v343
        %349 = vrot.lane.b32.xlu0 %v339, 17
        %v350 = vpop.permute.xlu0 %349
        %351 = vrot.lane.b32.xlu0 %v340, 17
        %v352 = vpop.permute.xlu0 %351
        %vm353 = vcmask 138240
        %v354 = vsel %vm353, %v350, %v352
        %v357 = vsel %vm353, 0.0, %v350
        %358 = vset.pattern.permute.xlu0 4
        %359 = vperm.xlu0 %358, %v201
        %v360 = vpop.permute.xlu0 %359
        %v362 = vmul.f32 %v357, %v360
        %v363 = vmul.f32 %v354, %v360
        %v364 = vadd.f32 %v345, %v362
        %v365 = vadd.f32 %v346, %v363
        %368 = vrot.lane.b32.xlu0 %v310, 16
        %v369 = vpop.permute.xlu0 %368
        %370 = vrot.lane.b32.xlu0 %v311, 16
        %v371 = vpop.permute.xlu0 %370
        %vm372 = vcmask 130048
        %v373 = vsel %vm372, %v369, %v371
        %v376 = vsel %vm372, 0.0, %v369
        %377 = vset.pattern.permute.xlu0 5
        %378 = vperm.xlu0 %377, %v201
        %v379 = vpop.permute.xlu0 %378
        %v381 = vmul.f32 %v376, %v379
        %v382 = vmul.f32 %v373, %v379
        %v383 = vadd.f32 %v364, %v381
        %v384 = vadd.f32 %v365, %v382
        %387 = vrot.lane.b32.xlu0 %v324, 15
        %v388 = vpop.permute.xlu0 %387
        %389 = vrot.lane.b32.xlu0 %v325, 15
        %v390 = vpop.permute.xlu0 %389
        %vm391 = vcmask 121856
        %v392 = vsel %vm391, %v388, %v390
        %v395 = vsel %vm391, 0.0, %v388
        %396 = vset.pattern.permute.xlu0 6
        %397 = vperm.xlu0 %396, %v201
        %v398 = vpop.permute.xlu0 %397
        %v400 = vmul.f32 %v395, %v398
        %v401 = vmul.f32 %v392, %v398
        %v402 = vadd.f32 %v383, %v400
        %v403 = vadd.f32 %v384, %v401
        %404 = vrot.lane.b32.xlu0 %v339, 1
        %v405 = vpop.permute.xlu0 %404
        %406 = vrot.lane.b32.xlu0 %v340, 1
        %v407 = vpop.permute.xlu0 %406
        %vm408 = vcmask 7168
        %v409 = vsel %vm408, %v405, %v407
        %v412 = vsel %vm408, 0.0, %v405
        %413 = vset.pattern.permute.xlu0 7
        %414 = vperm.xlu0 %413, %v201
        %v415 = vpop.permute.xlu0 %414
        %v417 = vmul.f32 %v412, %v415
        %v418 = vmul.f32 %v409, %v415
        %v419 = vadd.f32 %v402, %v417
        %v420 = vadd.f32 %v403, %v418
        %421 = vrot.lane.b32.xlu0 %v324, 127
        %v422 = vpop.permute.xlu0 %421
        %423 = vrot.lane.b32.xlu0 %v325, 127
        %v424 = vpop.permute.xlu0 %423
        %vm425 = vcmask 1039360
        %v426 = vsel %vm425, %v422, %v424
        %v429 = vsel %vm425, %v424, 0.0
        %430 = vset.pattern.permute.xlu0 9
        %431 = vperm.xlu0 %430, %v201
        %v432 = vpop.permute.xlu0 %431
        %v434 = vmul.f32 %v426, %v432
        %v435 = vmul.f32 %v429, %v432
        %v436 = vadd.f32 %v419, %v434
        %v437 = vadd.f32 %v420, %v435
        %438 = vrot.lane.b32.xlu0 %v339, 113
        %v439 = vpop.permute.xlu0 %438
        %440 = vrot.lane.b32.xlu0 %v340, 113
        %v441 = vpop.permute.xlu0 %440
        %vm442 = vcmask 924672
        %v443 = vsel %vm442, %v439, %v441
        %v446 = vsel %vm442, %v441, 0.0
        %447 = vset.pattern.permute.xlu0 10
        %448 = vperm.xlu0 %447, %v201
        %v449 = vpop.permute.xlu0 %448
        %v451 = vmul.f32 %v443, %v449
        %v452 = vmul.f32 %v446, %v449
        %v453 = vadd.f32 %v436, %v451
        %v454 = vadd.f32 %v437, %v452
        %455 = vrot.lane.b32.xlu0 %v310, 112
        %v456 = vpop.permute.xlu0 %455
        %457 = vrot.lane.b32.xlu0 %v311, 112
        %v458 = vpop.permute.xlu0 %457
        %vm459 = vcmask 916480
        %v460 = vsel %vm459, %v456, %v458
        %v463 = vsel %vm459, %v458, 0.0
        %464 = vset.pattern.permute.xlu0 11
        %465 = vperm.xlu0 %464, %v201
        %v466 = vpop.permute.xlu0 %465
        %v468 = vmul.f32 %v460, %v466
        %v469 = vmul.f32 %v463, %v466
        %v470 = vadd.f32 %v453, %v468
        %v471 = vadd.f32 %v454, %v469
        %472 = vrot.lane.b32.xlu0 %v324, 111
        %v473 = vpop.permute.xlu0 %472
        %474 = vrot.lane.b32.xlu0 %v325, 111
        %v475 = vpop.permute.xlu0 %474
        %vm476 = vcmask 908288
        %v477 = vsel %vm476, %v473, %v475
        %v480 = vsel %vm476, %v475, 0.0
        %481 = vset.pattern.permute.xlu0 12
        %482 = vperm.xlu0 %481, %v201
        %v483 = vpop.permute.xlu0 %482
        %v485 = vmul.f32 %v477, %v483
        %v486 = vmul.f32 %v480, %v483
        %v487 = vadd.f32 %v470, %v485
        %v488 = vadd.f32 %v471, %v486
        %489 = vset.pattern.permute.xlu0 14
        %490 = vperm.xlu0 %489, %v201
        %v491 = vpop.permute.xlu0 %490
        %v493 = vadd.f32 %v487, %v491
        %v494 = vadd.f32 %v488, %v491
        %v495 = vmax.f32 %v493, 0.0
        %v496 = vmax.f32 %v494, 0.0
        %497 = vst [vmem:[%s199] sm:$0xff] %v495
        %498 = vst [vmem:[%s199 + $0x8] sm:$0xff] %v496
        %s499 = sand.u32 %s97, 1
        %s500 = scalar_lea.sflag [#allocation4], %s499
        %s501 = sand.u32 %s97, 1
        %s502 = smul.addr %s501, 16
        %s503 = scalar_lea.vmem [#allocation7], %s502
        // Predicated region
        $region41: #{tpu_custom_call.1} parent=31 // pred_check
          %p504 = pneg %p107
        $region42: #{tpu_custom_call.1} parent=31 // pred_check_branch
          %506 = sbr.rel (%p504) target = $region44
        $region43: #{tpu_custom_call.1} parent=31 // pred_region
          %s508 = ssub.s32 256, 256
          %509 = vsyncadd %s500, %s508
          %s510 = smul.addr %s21, 2
          %s511 = smul.addr %s510, 128
          %s512 = scalar_lea.hbm %s3, %s511
          %s514 = sshll.u32 %s503, 4
          %s515 = int_to_ptr.vmem [resolvable:$true] %s514
          %517 = dma.vmem_to_hbm [thread:$0]  %s515, 256, %s512, %s500
        $region44: #{tpu_custom_call.1} parent=31 // pred_fallthru
          _
      $region32: #{tpu_custom_call.1} parent=5 // pred_fallthru
        _
      %p518 = scmp.le.s32.totalorder 2, %s16
      // Predicated region
      $region45: #{tpu_custom_call.1} parent=5 // pred_check
        %p519 = pneg %p518
      $region46: #{tpu_custom_call.1} parent=5 // pred_check_branch
        %521 = sbr.rel (%p519) target = $region48
      $region47: #{tpu_custom_call.1} parent=5 // pred_region
        %s522 = ssub.s32 %s16, 2
        // Predicated region
        $region49: #{tpu_custom_call.1} parent=47 // pred_check
          %p523 = pneg %p113
        $region50: #{tpu_custom_call.1} parent=47 // pred_check_branch
          %525 = sbr.rel (%p523) target = $region52
        $region51: #{tpu_custom_call.1} parent=47 // pred_region
          %s526 = sand.u32 %s98, 1
          %s527 = scalar_lea.sflag [#allocation4], %s526
          %s528 = sand.u32 %s98, 1
          %s529 = smul.addr %s528, 16
          %s530 = scalar_lea.vmem [#allocation7], %s529
          %531 = dma.done %s527, 256
        $region52: #{tpu_custom_call.1} parent=47 // pred_fallthru
          _
      $region48: #{tpu_custom_call.1} parent=5 // pred_fallthru
        _
    $region6: #{tpu_custom_call.1} parent=1 // loop_footer
      %s20 = sadd.s32 1, %s16
    $region7: #{tpu_custom_call.1} parent=1 // loop_footer_branch
      %15 = sbr.rel target = $region3
    $region8: #{tpu_custom_call.1} parent=1 // loop_exit
      _
    %532 = vsyncpa [#allocation3], 1
    %s533 = scalar_lea.sflag [#allocation3], 1
    %534 = vsyncpa %s533, 1
    %535 = vsyncpa [#allocation6], 1
    %536 = vsyncpa [#allocation4], 1
    %s537 = scalar_lea.sflag [#allocation4], 1
    %538 = vsyncpa %s537, 1

</llo_original>
